<compile_context>
chip_gen: v6e
topology: v6e:2x2x1
jax: 0.10.0
libtpu: 0.0.40
codegen_flags: <defaults>
</compile_context>

<pallas_src>
import functools

import jax
import jax.numpy as jnp
from jax import lax
from jax.experimental import pallas as pl
from jax.experimental.pallas import tpu as pltpu


# Safe on v7x (64 MiB physical VMEM per TC) and well under v5e/v6e's 128 MiB.
_VMEM_LIMIT_BYTES = 48 * 1024 * 1024


# ----------------------------- helpers -------------------------------------

def _pick_tile(dim, target, min_tile):
    """Largest power-of-two divisor of `dim` that is <= target (>= min_tile),
    falling back to the full dimension (always a legal block size)."""
    if dim <= target:
        return dim
    t = target
    while t >= min_tile:
        if dim % t == 0:
            return t
        t //= 2
    return dim


def _matmul_tile_defaults():
    """v6e/v7x MXU is 2x256^2 -> 256-wide tiles; v5e is 4x128^2 -> keep 128."""
    try:
        kind = jax.devices()[0].device_kind.lower()
    except Exception:
        kind = ""
    if "v5 lite" in kind or "v5e" in kind or "v5lite" in kind:
        return 128, 128, 512
    return 256, 256, 512


# ----------------------------- Pallas kernels ------------------------------

def _matmul_kernel(x_ref, w_ref, o_ref, acc_ref):
    @pl.when(pl.program_id(2) == 0)
    def _init():
        acc_ref[...] = jnp.zeros(acc_ref.shape, acc_ref.dtype)

    acc_ref[...] += jnp.dot(
        x_ref[...], w_ref[...], preferred_element_type=jnp.float32
    )

    @pl.when(pl.program_id(2) == pl.num_programs(2) - 1)
    def _finalize():
        o_ref[...] = acc_ref[...].astype(o_ref.dtype)


def _matmul_bias_kernel(x_ref, w_ref, b_ref, o_ref, acc_ref):
    @pl.when(pl.program_id(2) == 0)
    def _init():
        acc_ref[...] = jnp.zeros(acc_ref.shape, acc_ref.dtype)

    acc_ref[...] += jnp.dot(
        x_ref[...], w_ref[...], preferred_element_type=jnp.float32
    )

    @pl.when(pl.program_id(2) == pl.num_programs(2) - 1)
    def _finalize():
        o_ref[...] = (acc_ref[...] + b_ref[...]).astype(o_ref.dtype)


def _flash_attn_kernel(q_ref, k_ref, v_ref, o_ref, m_sc, l_sc, acc_sc,
                       *, heads, dim_head):
    """One (batch, q-tile) per (grid0, grid1); online softmax over kv tiles.

    Block shapes (all lane-dense, last dim = heads*dim_head):
      q_ref : (1, tq,  H*dh)   bf16 (scale already folded into W_q)
      k_ref : (1, tkv, H*dh)
      v_ref : (1, tkv, H*dh)
      o_ref : (1, tq,  H*dh)
    Scratch (persists across the kv grid axis):
      m_sc, l_sc : (H, tq, 1)   f32
      acc_sc     : (H, tq, dh)  f32
    """
    ki = pl.program_id(2)

    @pl.when(ki == 0)
    def _init():
        m_sc[...] = jnp.full(m_sc.shape, -jnp.inf, dtype=m_sc.dtype)
        l_sc[...] = jnp.zeros(l_sc.shape, l_sc.dtype)
        acc_sc[...] = jnp.zeros(acc_sc.shape, acc_sc.dtype)

    for h in range(heads):
        lo = h * dim_head
        q_h = q_ref[0, :, lo:lo + dim_head]      # (tq,  dh) bf16, pre-scaled
        k_h = k_ref[0, :, lo:lo + dim_head]      # (tkv, dh)
        v_h = v_ref[0, :, lo:lo + dim_head]      # (tkv, dh)

        # scores (tq, tkv): contract on dh of both operands -> no explicit k.T
        s = lax.dot_general(
            q_h, k_h,
            dimension_numbers=(((1,), (1,)), ((), ())),
            preferred_element_type=jnp.float32,
        )

        m_prev = m_sc[h]                                             # (tq, 1)
        m_new = jnp.maximum(m_prev, jnp.max(s, axis=-1, keepdims=True))
        alpha = jnp.exp(m_prev - m_new)
        p = jnp.exp(s - m_new)                                       # (tq, tkv)

        l_sc[h] = alpha * l_sc[h] + jnp.sum(p, axis=-1, keepdims=True)

        pv = lax.dot_general(
            p.astype(v_h.dtype), v_h,
            dimension_numbers=(((1,), (0,)), ((), ())),
            preferred_element_type=jnp.float32,
        )                                                            # (tq, dh)
        acc_sc[h] = alpha * acc_sc[h] + pv
        m_sc[h] = m_new

    @pl.when(ki == pl.num_programs(2) - 1)
    def _finalize():
        for h in range(heads):
            lo = h * dim_head
            inv_l = pl.reciprocal(l_sc[h], approx=True)              # EUP slot
            o_ref[0, :, lo:lo + dim_head] = (acc_sc[h] * inv_l).astype(o_ref.dtype)


# ----------------------------- wrappers -------------------------------------

def _pallas_matmul(x, w, b=None, *, out_dtype=None, tm=None, tn=None, tk=None):
    """Tiled (M,K)@(K,C) [+ bias] with f32 accumulation; bf16-friendly."""
    M, K = x.shape
    _, C = w.shape
    dtm, dtn, dtk = _matmul_tile_defaults()
    tm = _pick_tile(M, tm or dtm, 8)
    tn = _pick_tile(C, tn or dtn, 128)
    tk = _pick_tile(K, tk or dtk, 128)
    grid = (M // tm, C // tn, K // tk)
    out_dtype = out_dtype or x.dtype

    in_specs = [
        pl.BlockSpec((tm, tk), lambda i, j, k: (i, k)),
        pl.BlockSpec((tk, tn), lambda i, j, k: (k, j)),
    ]
    if b is None:
        kernel = _matmul_kernel
        args = (x, w)
    else:
        kernel = _matmul_bias_kernel
        in_specs.append(pl.BlockSpec((1, tn), lambda i, j, k: (0, j)))
        args = (x, w, b.reshape(1, C).astype(jnp.float32))

    bytes_accessed = (M * K * x.dtype.itemsize + K * C * w.dtype.itemsize
                      + M * C * jnp.dtype(out_dtype).itemsize)
    return pl.pallas_call(
        kernel,
        out_shape=jax.ShapeDtypeStruct((M, C), out_dtype),
        grid=grid,
        in_specs=in_specs,
        out_specs=pl.BlockSpec((tm, tn), lambda i, j, k: (i, j)),
        scratch_shapes=[pltpu.VMEM((tm, tn), jnp.float32)],
        compiler_params=pltpu.CompilerParams(
            dimension_semantics=("parallel", "parallel", "arbitrary"),
            vmem_limit_bytes=_VMEM_LIMIT_BYTES,
        ),
        cost_estimate=pl.CostEstimate(
            flops=2 * M * K * C,
            transcendentals=0,
            bytes_accessed=bytes_accessed,
        ),
    )(*args)


def _pallas_flash_attention(q, k, v, *, heads, dim_head, tq=256, tkv=512):
    """q/k/v: (B, N, H*dh) bf16 -> attention output (B, N, H*dh) bf16."""
    B, N, inner = q.shape
    tq = _pick_tile(N, tq, 8)
    tkv = _pick_tile(N, tkv, 8)
    grid = (B, N // tq, N // tkv)

    q_spec = pl.BlockSpec((1, tq, inner), lambda b, qi, ki: (b, qi, 0))
    # TODO(synk): if a trace sweep shows exposed K/V DMA, add
    # pipeline_mode=pl.Buffered(3) on k_spec/v_spec (sweep, don't assume).
    k_spec = pl.BlockSpec((1, tkv, inner), lambda b, qi, ki: (b, ki, 0))
    v_spec = pl.BlockSpec((1, tkv, inner), lambda b, qi, ki: (b, ki, 0))
    o_spec = pl.BlockSpec((1, tq, inner), lambda b, qi, ki: (b, qi, 0))

    itemsize = q.dtype.itemsize
    n_q_tiles = N // tq
    # Q read once per q-tile, K/V re-read once per q-tile, output written once.
    bytes_accessed = itemsize * B * inner * (N + 2 * N * n_q_tiles + N)

    return pl.pallas_call(
        functools.partial(_flash_attn_kernel, heads=heads, dim_head=dim_head),
        out_shape=jax.ShapeDtypeStruct((B, N, inner), q.dtype),
        grid=grid,
        in_specs=[q_spec, k_spec, v_spec],
        out_specs=o_spec,
        scratch_shapes=[
            pltpu.VMEM((heads, tq, 1), jnp.float32),         # running max m
            pltpu.VMEM((heads, tq, 1), jnp.float32),         # running denom l
            pltpu.VMEM((heads, tq, dim_head), jnp.float32),  # running numerator
        ],
        compiler_params=pltpu.CompilerParams(
            dimension_semantics=("parallel", "parallel", "arbitrary"),
            vmem_limit_bytes=_VMEM_LIMIT_BYTES,
        ),
        cost_estimate=pl.CostEstimate(
            flops=4 * B * heads * N * N * dim_head,
            transcendentals=B * heads * N * N,
            bytes_accessed=bytes_accessed,
        ),
    )(q, k, v)


# ----------------------------- module ---------------------------------------

class SelfAttentionPallas:
    """Pallas port of the PyTorch SelfAttention module (forward pass)."""

    def __init__(self, dim, heads=8, dim_head=64, dropout=0.0, key=None):
        assert dropout == 0.0, "dropout > 0 not implemented in the Pallas kernels"
        inner_dim = dim_head * heads
        self.dim = dim
        self.heads = heads
        self.dim_head = dim_head
        self.inner_dim = inner_dim
        self.scale = dim_head ** (-0.5)
        self.project_out = not (heads == 1 and dim_head == dim)

        if key is None:
            key = jax.random.PRNGKey(0)
        k1, k2, k3 = jax.random.split(key, 3)
        # Deterministic synthetic init; weights stored as (in, out).
        w_qkv = jax.random.normal(k1, (dim, inner_dim * 3), jnp.float32) * 0.02
        # Kernel-side params: bf16 operands (MXU-native); the softmax scale is
        # folded into the Q columns so the attention kernel never rescales Q.
        self.wq_bf = (w_qkv[:, :inner_dim] * self.scale).astype(jnp.bfloat16)
        self.wk_bf = w_qkv[:, inner_dim:2 * inner_dim].astype(jnp.bfloat16)
        self.wv_bf = w_qkv[:, 2 * inner_dim:].astype(jnp.bfloat16)
        if self.project_out:
            w_out = jax.random.normal(k2, (inner_dim, dim), jnp.float32) * 0.02
            self.wout_bf = w_out.astype(jnp.bfloat16)
            self.b_out = jax.random.normal(k3, (dim,), jnp.float32) * 0.02
        else:
            self.wout_bf = None
            self.b_out = None

    def __call__(self, x):
        # x: (B, N, dim)
        B, N, dim = x.shape
        x2d = x.reshape(B * N, dim).astype(jnp.bfloat16)

        # --- three contiguous projections: Q (pre-scaled), K, V ---
        q = _pallas_matmul(x2d, self.wq_bf, out_dtype=jnp.bfloat16)
        k = _pallas_matmul(x2d, self.wk_bf, out_dtype=jnp.bfloat16)
        v = _pallas_matmul(x2d, self.wv_bf, out_dtype=jnp.bfloat16)
        q = q.reshape(B, N, self.inner_dim)   # free reshapes
        k = k.reshape(B, N, self.inner_dim)
        v = v.reshape(B, N, self.inner_dim)

        # --- flash attention; head split fused inside the kernel ---
        out = _pallas_flash_attention(q, k, v, heads=self.heads,
                                      dim_head=self.dim_head)  # (B, N, H*dh)

        out2d = out.reshape(B * N, self.inner_dim)              # free reshape

        # --- output projection (tiled matmul + bias) ---
        if self.project_out:
            y = _pallas_matmul(out2d, self.wout_bf, self.b_out,
                               out_dtype=jnp.float32)
            return y.reshape(B, N, self.dim)
        return out2d.astype(x.dtype).reshape(B, N, self.inner_dim)


# Pure-JAX reference (f32 math with the same bf16-rounded weights).
def _reference(module, x):
    B, N, dim = x.shape
    H, dh = module.heads, module.dim_head
    xf = x.astype(jnp.float32).reshape(B * N, dim)
    q = xf @ module.wq_bf.astype(jnp.float32)   # scale already folded in
    k = xf @ module.wk_bf.astype(jnp.float32)
    v = xf @ module.wv_bf.astype(jnp.float32)

    def split(t):
        return jnp.transpose(t.reshape(B, N, H, dh), (0, 2, 1, 3))

    q, k, v = split(q), split(k), split(v)
    dots = jnp.einsum("bhnd,bhmd->bhnm", q, k)
    attn = jax.nn.softmax(dots, axis=-1)
    out = jnp.einsum("bhnm,bhmd->bhnd", attn, v)
    out = jnp.transpose(out, (0, 2, 1, 3)).reshape(B * N, H * dh)
    if module.project_out:
        out = out @ module.wout_bf.astype(jnp.float32) + module.b_out
        return out.reshape(B, N, module.dim)
    return out.reshape(B, N, module.inner_dim)


if __name__ == "__main__":
    key = jax.random.PRNGKey(0)
    kx, kp = jax.random.split(key)

    B, N, dim = 2, 8, 32
    heads, dim_head = 4, 16

    x = jax.random.normal(kx, (B, N, dim), jnp.float32)
    module = SelfAttentionPallas(dim, heads=heads, dim_head=dim_head, key=kp)

    y = module(x)
    y = jax.block_until_ready(y)

    y_ref = _reference(module, x)
    assert y.shape == (B, N, dim), y.shape
    # bf16 operands + approx reciprocal -> relaxed tolerance vs f32 reference
    assert jnp.allclose(y.astype(jnp.float32), y_ref, atol=2e-2, rtol=2e-2), \
        "mismatch vs reference"

    print("KERNEL_OK")
</pallas_src>

<mosaic_0001>
module attributes {stable_mosaic.version = 11 : i64} {
  func.func @_matmul_kernel(%arg0: i32, %arg1: i32, %arg2: i32, %arg3: memref<16x32xbf16, #tpu.memory_space<vmem>>, %arg4: memref<32x64xbf16, #tpu.memory_space<vmem>>, %arg5: memref<16x64xbf16, #tpu.memory_space<vmem>>, %arg6: memref<16x64xf32, #tpu.memory_space<vmem>>) attributes {dimension_semantics = [#tpu.dimension_semantics<parallel>, #tpu.dimension_semantics<parallel>, #tpu.dimension_semantics<arbitrary>], iteration_bounds = array<i64: 1, 1, 1>, scalar_prefetch = 0 : i64, scratch_operands = 1 : i64, tpu.core_type = #tpu.core_type<tc>, window_params = [{transform_indices = @transform_0, window_bounds = array<i64: 16, 32>}, {transform_indices = @transform_1, window_bounds = array<i64: 32, 64>}, {transform_indices = @transform_2, window_bounds = array<i64: 16, 64>}]} {
    %c0_i32 = arith.constant 0 : i32
    %0 = arith.cmpi eq, %arg2, %c0_i32 : i32
    %1 = arith.extui %0 : i1 to i32
    %c0_i32_0 = arith.constant 0 : i32
    %2 = arith.cmpi ne, %1, %c0_i32_0 : i32
    scf.if %2 {
      %cst_10 = arith.constant 0.000000e+00 : f32
      %12 = vector.broadcast %cst_10 : f32 to vector<16x64xf32>
      %c0_11 = arith.constant 0 : index
      %c0_12 = arith.constant 0 : index
      %13 = vector.load %arg6[%c0_11, %c0_12] : memref<16x64xf32, #tpu.memory_space<vmem>>, vector<16x64xf32>
      tpu.vector_store %arg6[%c0_11, %c0_12], %12 {strides = array<i32>} : memref<16x64xf32, #tpu.memory_space<vmem>>, vector<16x64xf32>,
    } else {
    }
    %c0 = arith.constant 0 : index
    %c0_1 = arith.constant 0 : index
    %3 = vector.load %arg6[%c0, %c0_1] : memref<16x64xf32, #tpu.memory_space<vmem>>, vector<16x64xf32>
    %c0_2 = arith.constant 0 : index
    %c0_3 = arith.constant 0 : index
    %4 = vector.load %arg3[%c0_2, %c0_3] : memref<16x32xbf16, #tpu.memory_space<vmem>>, vector<16x32xbf16>
    %c0_4 = arith.constant 0 : index
    %c0_5 = arith.constant 0 : index
    %5 = vector.load %arg4[%c0_4, %c0_5] : memref<32x64xbf16, #tpu.memory_space<vmem>>, vector<32x64xbf16>
    %cst = arith.constant dense<0.000000e+00> : vector<16x64xf32>
    %6 = tpu.matmul %4, %5, %cst {dimension_numbers = #tpu.dot_dimension_numbers<[1], [0], [0], [1], [0, 0, 1, 1], [], []>} : vector<16x32xbf16>, vector<32x64xbf16>, vector<16x64xf32> -> vector<16x64xf32>
    %7 = arith.addf %3, %6 : vector<16x64xf32>
    %c0_6 = arith.constant 0 : index
    %c0_7 = arith.constant 0 : index
    %8 = vector.load %arg6[%c0_6, %c0_7] : memref<16x64xf32, #tpu.memory_space<vmem>>, vector<16x64xf32>
    tpu.vector_store %arg6[%c0_6, %c0_7], %7 {strides = array<i32>} : memref<16x64xf32, #tpu.memory_space<vmem>>, vector<16x64xf32>,
    %c0_i32_8 = arith.constant 0 : i32
    %9 = arith.cmpi eq, %arg2, %c0_i32_8 : i32
    %10 = arith.extui %9 : i1 to i32
    %c0_i32_9 = arith.constant 0 : i32
    %11 = arith.cmpi ne, %10, %c0_i32_9 : i32
    scf.if %11 {
      %c0_10 = arith.constant 0 : index
      %c0_11 = arith.constant 0 : index
      %12 = vector.load %arg6[%c0_10, %c0_11] : memref<16x64xf32, #tpu.memory_space<vmem>>, vector<16x64xf32>
      %13 = arith.truncf %12 : vector<16x64xf32> to vector<16x64xbf16>
      %c0_12 = arith.constant 0 : index
      %c0_13 = arith.constant 0 : index
      %14 = vector.load %arg5[%c0_12, %c0_13] : memref<16x64xbf16, #tpu.memory_space<vmem>>, vector<16x64xbf16>
      tpu.vector_store %arg5[%c0_12, %c0_13], %13 {strides = array<i32>} : memref<16x64xbf16, #tpu.memory_space<vmem>>, vector<16x64xbf16>,
    } else {
    }
    return
  }
  func.func @transform_0(%arg0: i32, %arg1: i32, %arg2: i32) -> (i32, i32) {
    %c0_i32 = arith.constant 0 : i32
    return %arg0, %arg2 : i32, i32
  }
  func.func @transform_1(%arg0: i32, %arg1: i32, %arg2: i32) -> (i32, i32) {
    %c0_i32 = arith.constant 0 : i32
    return %arg2, %arg1 : i32, i32
  }
  func.func @transform_2(%arg0: i32, %arg1: i32, %arg2: i32) -> (i32, i32) {
    %c0_i32 = arith.constant 0 : i32
    return %arg0, %arg1 : i32, i32
  }
}

</mosaic_0001>

<llo_original>
// kernel: tpu_custom_call.1
$region0: #{tpu_custom_call.1}
  #allocation0 [shape = 'u32[]', space=smem, size = 0x4, offset = 0x4, fixed_abs, tag = 'smem constant byte address 0x4 - core index']
  #allocation1 [shape = 'u32[144,128]{1,0:T(1,128)}', space=vmem, size = 0x12000, scoped, tag = 'internal scratch']
  #allocation2 [shape = 'f32[16,64]{1,0:T(8,128)}', space=vmem, size = 0x2000, scoped, tag = 'scratch operand']
  %s0 = inlined_call_operand.hbm [shape: bf16[16,32], index: 0, kind: input, shape index: {}]
  %s1 = inlined_call_operand.hbm [shape: bf16[32,64], index: 1, kind: input, shape index: {}]
  %s2 = inlined_call_operand.hbm [shape: bf16[16,64], index: 2, kind: output, shape index: {}]
  %s3 = sld [smem:[#allocation0]]
  $region34: #{tpu_custom_call.1} parent=0
    _
  %s5 = ssub.s32 1, %s3
  %s6 = scalar_select 0, %s5, %s3
  $region1: #{tpu_custom_call.1} parent=0
    #allocation3 [shape = 'u8[4096]{0}', space=vmem, size = 0x1000, scoped, tag = 'input window, operand 0, single buffered']
    #allocation4 [shape = 's32[1]{0}', space=sflag, size = 0x4, scoped, tag = 'scoped memory for tpu_custom_call.1']
    #allocation5 [shape = 's32[1]{0}', space=sflag, size = 0x4, scoped, tag = 'scoped memory for tpu_custom_call.1']
    #allocation6 [shape = 'u8[8192]{0}', space=vmem, size = 0x2000, scoped, tag = 'input window, operand 1, single buffered']
    #allocation7 [shape = 's32[1]{0}', space=sflag, size = 0x4, scoped, tag = 'scoped memory for tpu_custom_call.1']
    #allocation8 [shape = 'u8[4096]{0}', space=vmem, size = 0x1000, scoped, tag = 'output window, operand 0, single buffered']
    %7 = vsyncpa [#allocation4], 0
    %8 = vsyncpa [#allocation7], 0
    %9 = vsyncpa [#allocation5], 0
    // Predicated region
    $region2: #{tpu_custom_call.1} parent=1 // pred_check
      _
    $region3: #{tpu_custom_call.1} parent=1 // pred_check_branch
      %11 = sbr.rel (0) target = $region5
    $region4: #{tpu_custom_call.1} parent=1 // pred_region
      %s13 = ssub.s32 128, 128
      %14 = vsyncadd [#allocation4], %s13
      %s15 = sshll.u32 [#allocation3], 4
      %s16 = int_to_ptr.vmem [resolvable:$true] %s15
      %21 = dma.hbm_to_vmem [thread:$0]  %s0, 128, %s16, [#allocation4], 64, 64, 4
    $region5: #{tpu_custom_call.1} parent=1 // pred_fallthru
      _
    // Predicated region
    $region6: #{tpu_custom_call.1} parent=1 // pred_check
      _
    $region7: #{tpu_custom_call.1} parent=1 // pred_check_branch
      %23 = sbr.rel (0) target = $region9
    $region8: #{tpu_custom_call.1} parent=1 // pred_region
      %s25 = ssub.s32 256, 256
      %26 = vsyncadd [#allocation7], %s25
      %s27 = sshll.u32 [#allocation6], 4
      %s28 = int_to_ptr.vmem [resolvable:$true] %s27
      %33 = dma.hbm_to_vmem [thread:$0]  %s1, 256, %s28, [#allocation7], 64, 64, 4
    $region9: #{tpu_custom_call.1} parent=1 // pred_fallthru
      _
    // Predicated region
    $region10: #{tpu_custom_call.1} parent=1 // pred_check
      _
    $region11: #{tpu_custom_call.1} parent=1 // pred_check_branch
      %35 = sbr.rel (0) target = $region13
    $region12: #{tpu_custom_call.1} parent=1 // pred_region
      %36 = dma.done [#allocation4], 128
    $region13: #{tpu_custom_call.1} parent=1 // pred_fallthru
      _
    // Predicated region
    $region14: #{tpu_custom_call.1} parent=1 // pred_check
      _
    $region15: #{tpu_custom_call.1} parent=1 // pred_check_branch
      %38 = sbr.rel (0) target = $region17
    $region16: #{tpu_custom_call.1} parent=1 // pred_region
      %39 = dma.done [#allocation7], 256
    $region17: #{tpu_custom_call.1} parent=1 // pred_fallthru
      _
    %p41 = scmp.eq.s32.totalorder 0, 0
    // Predicated region
    $region18: #{tpu_custom_call.1} parent=1 // pred_check
      %p42 = pneg %p41
    $region19: #{tpu_custom_call.1} parent=1 // pred_check_branch
      %44 = sbr.rel (%p42) target = $region21
    $region20: #{tpu_custom_call.1} parent=1 // pred_region
      %vm45 = vcmask 523264
      %46 = vst.msk [vmem:[#allocation2] sm:$0xff] %vm45, 0.0
      %47 = vst.msk [vmem:[#allocation2 + $0x8] sm:$0xff] %vm45, 0.0
    $region21: #{tpu_custom_call.1} parent=1 // pred_fallthru
      _
    %v48 = vld [vmem:[#allocation2] sm:$0xff]
    %v49 = vld [vmem:[#allocation2 + $0x8] sm:$0xff]
    %v50 = vld [vmem:[#allocation3] sm:$0xf]
    %v51 = vld [vmem:[#allocation3 + $0x4] sm:$0xf]
    %v52 = vld [vmem:[#allocation6] sm:$0xf]
    %v53 = vld [vmem:[#allocation6 + $0x4] sm:$0xf]
    %v54 = vld [vmem:[#allocation6 + $0x8] sm:$0xf]
    %v55 = vld [vmem:[#allocation6 + $0xc] sm:$0xf]
    %v58 = vunpack.c.l.b16 %v50
    %v59 = vunpack.c.l.b16 %v51
    %v60 = vpack.c.b16 %v59, %v58
    %v65 = vunpack.c.l.b16 %v52
    %v66 = vunpack.c.l.b16 %v53
    %v67 = vunpack.c.l.b16 %v54
    %v68 = vunpack.c.l.b16 %v55
    %v69 = vpack.c.b16 %v66, %v65
    %v70 = vpack.c.b16 %v68, %v67
    %vm73 = vcmask 261120
    %v75 = vsel %vm73, %v60, 0
    %77 = vmatprep.subr.bf16.mxu0 0
    %78 = vmatpush1.bf16.msra.mxu0 0
    %79 = vmatprep.subr.bf16.mxu0 0
    %80 = vmatpush1.bf16.msra.mxu0 0
    %81 = vmatprep.subr.bf16.mxu0 0
    %82 = vmatpush1.bf16.msra.mxu0 0
    %83 = vmatprep.subr.bf16.mxu0 0
    %84 = vmatpush1.bf16.msra.mxu0 0
    %85 = vmatprep.subr.bf16.mxu0 0
    %86 = vmatpush1.bf16.msra.mxu0 0
    %87 = vmatprep.subr.bf16.mxu0 0
    %88 = vmatpush1.bf16.msra.mxu0 0
    %89 = vmatprep.subr.bf16.mxu0 0
    %90 = vmatpush1.bf16.msra.mxu0 %v70
    %91 = vmatprep.subr.bf16.mxu0 0
    %92 = vmatpush1.bf16.msra.mxu0 %v69
    %93 = vmatprep.subr.bf16.mxu0 0
    %94 = vmatpush2.bf16.msra.mxu0 0
    %95 = vmatprep.subr.bf16.mxu0 0
    %96 = vmatpush2.bf16.msra.mxu0 0
    %97 = vmatprep.subr.bf16.mxu0 0
    %98 = vmatpush2.bf16.msra.mxu0 0
    %99 = vmatprep.subr.bf16.mxu0 0
    %100 = vmatpush2.bf16.msra.mxu0 0
    %101 = vmatprep.subr.bf16.mxu0 0
    %102 = vmatpush2.bf16.msra.mxu0 0
    %103 = vmatprep.subr.bf16.mxu0 0
    %104 = vmatpush2.bf16.msra.mxu0 0
    %105 = vmatprep.subr.bf16.mxu0 0
    %106 = vmatpush2.bf16.msra.mxu0 0
    %107 = vmatprep.subr.bf16.mxu0 0
    %108 = vmatpush2.bf16.msra.mxu0 0
    %109 = vmatprep.mubr.bf16.mxu0 0
    %110 = vmatmul.mubr.bf16.gmra.mxu0 %v75
    %v111 = vpop.f32.mrf.mxu0
    %v112 = vadd.f32 0.0, %v111
    %v113 = vpop.f32.mrf.mxu0
    %v114 = vpop.f32.mrf.mxu0
    %v115 = vadd.f32 0.0, %v114
    %v116 = vpop.f32.mrf.mxu0
    %117 = vdwg.mxu0
    %v118 = vadd.f32 %v48, %v112
    %v119 = vadd.f32 %v49, %v115
    %vm120 = vcmask 523264
    %121 = vst.msk [vmem:[#allocation2] sm:$0xff] %vm120, %v118
    %122 = vst.msk [vmem:[#allocation2 + $0x8] sm:$0xff] %vm120, %v119
    // Predicated region
    $region22: #{tpu_custom_call.1} parent=1 // pred_check
      %p123 = pneg %p41
    $region23: #{tpu_custom_call.1} parent=1 // pred_check_branch
      %125 = sbr.rel (%p123) target = $region25
    $region24: #{tpu_custom_call.1} parent=1 // pred_region
      %v126 = vld [vmem:[#allocation2] sm:$0xff]
      %v127 = vld [vmem:[#allocation2 + $0x8] sm:$0xff]
      %v128 = vpack.c.bf16 %v127, %v126
      %v130 = vunpack.c.l.b16 %v128
      %v131 = vunpack.c.h.b16 %v128
      %v132 = vpack.c.b16 %v130, %v130
      %v133 = vpack.c.b16 %v131, %v131
      %vm136 = vcmask 519168
      %137 = vst.msk [vmem:[#allocation8] sm:$0xf] %vm136, %v132
      %138 = vst.msk [vmem:[#allocation8 + $0x4] sm:$0xf] %vm136, %v133
    $region25: #{tpu_custom_call.1} parent=1 // pred_fallthru
      _
    // Predicated region
    $region26: #{tpu_custom_call.1} parent=1 // pred_check
      _
    $region27: #{tpu_custom_call.1} parent=1 // pred_check_branch
      %140 = sbr.rel (0) target = $region29
    $region28: #{tpu_custom_call.1} parent=1 // pred_region
      %s142 = ssub.s32 128, 128
      %143 = vsyncadd [#allocation5], %s142
      %s144 = sshll.u32 [#allocation8], 4
      %s145 = int_to_ptr.vmem [resolvable:$true] %s144
      %150 = dma.vmem_to_hbm [thread:$0]  %s145, 128, %s2, [#allocation5], 64, 64, 4
    $region29: #{tpu_custom_call.1} parent=1 // pred_fallthru
      _
    // Predicated region
    $region30: #{tpu_custom_call.1} parent=1 // pred_check
      _
    $region31: #{tpu_custom_call.1} parent=1 // pred_check_branch
      %152 = sbr.rel (0) target = $region33
    $region32: #{tpu_custom_call.1} parent=1 // pred_region
      %153 = dma.done [#allocation5], 128
    $region33: #{tpu_custom_call.1} parent=1 // pred_fallthru
      _
    %154 = vsyncpa [#allocation4], 1
    %155 = vsyncpa [#allocation7], 1
    %156 = vsyncpa [#allocation5], 1

</llo_original>
